<compile_context>
chip_gen: v7x
topology: tpu7x:2x2x1
jax: 0.10.0
libtpu: 0.0.40
codegen_flags: <defaults>
</compile_context>

<pallas_src>
import jax
import jax.numpy as jnp
from jax.experimental import pallas as pl
from jax.experimental.pallas import tpu as pltpu

PAD_WIDTH = 256  # uniform lane-dense feature width (multiple of 128)


def make_mlp_kernel(row_offsets, pad_width, num_layers):
    """Build a fused MLP kernel over a packed weight slab.

    row_offsets: static tuple of row offsets of each layer's weight block
                 inside the packed (sum_rows, pad_width) weight slab.
    """

    def kernel(x_ref, w_ref, b_ref, o_ref):
        B = x_ref.shape[0]
        h = x_ref[...]
        for l in range(num_layers):
            r0, r1 = row_offsets[l], row_offsets[l + 1]
            w = w_ref[r0:r1, :]                                   # static slice
            b = jnp.broadcast_to(b_ref[l:l + 1, :], (B, pad_width))  # hoisted bcast
            h = jnp.dot(h, w, preferred_element_type=jnp.float32) + b
            if l < num_layers - 1:                                 # no relu after fc4
                h = jnp.maximum(h, 0.0)
        o_ref[...] = h.astype(o_ref.dtype)

    return kernel


def mlp_forward(x, w_slab, b_slab, row_offsets, out_features):
    """x: (B, input_size) f32.  w_slab: (sum_rows, PAD) f32.  b_slab: (L, PAD) f32."""
    B = x.shape[0]
    pad_width = w_slab.shape[1]
    num_layers = b_slab.shape[0]

    vmem = pl.BlockSpec(memory_space=pltpu.MemorySpace.VMEM)
    out_padded = pl.pallas_call(
        make_mlp_kernel(tuple(row_offsets), pad_width, num_layers),
        out_shape=jax.ShapeDtypeStruct((B, pad_width), jnp.float32),
        in_specs=[vmem, vmem, vmem],
        out_specs=vmem,
    )(x, w_slab, b_slab)
    # Lane-dense (B, 256) padded output -> slice back to the real 3 features.
    return out_padded[:, :out_features]


def init_linear(key, in_features, out_features):
    """Deterministic init mimicking nn.Linear's U(-1/sqrt(fan_in), 1/sqrt(fan_in)).
    Returns W with shape (in, out) and b with shape (out,), unpadded."""
    kw, kb = jax.random.split(key)
    bound = 1.0 / jnp.sqrt(jnp.float32(in_features))
    w = jax.random.uniform(kw, (in_features, out_features), jnp.float32,
                           minval=-bound, maxval=bound)
    b = jax.random.uniform(kb, (out_features,), jnp.float32,
                           minval=-bound, maxval=bound)
    return w, b


def pack_params(params, pad_width=PAD_WIDTH):
    """Zero-pad each layer's (W, b) to pad_width lanes and pack:
       - weights stacked row-wise into one (sum_rows, pad_width) slab,
       - biases stacked into one (num_layers, pad_width) slab.
    The first layer keeps its true row count (= input_size, assumed multiple
    of 8); later layers get pad_width rows (matching the padded activations).
    """
    w_blocks, b_rows, row_sizes = [], [], []
    for i, (w, b) in enumerate(params):
        in_f, out_f = w.shape
        rows = in_f if i == 0 else pad_width
        w_p = jnp.zeros((rows, pad_width), jnp.float32).at[:in_f, :out_f].set(w)
        b_p = jnp.zeros((pad_width,), jnp.float32).at[:out_f].set(b)
        w_blocks.append(w_p)
        b_rows.append(b_p)
        row_sizes.append(rows)

    w_slab = jnp.concatenate(w_blocks, axis=0)
    b_slab = jnp.stack(b_rows, axis=0)

    offsets = [0]
    for r in row_sizes:
        offsets.append(offsets[-1] + r)
    return w_slab, b_slab, tuple(offsets)


def reference_forward(x, params):
    h = x
    for i, (w, b) in enumerate(params):
        h = h @ w + b
        if i < len(params) - 1:
            h = jnp.maximum(h, 0.0)
    return h


if __name__ == "__main__":
    input_size = 32
    batch = 8
    dims = [input_size, 243, 193, 93, 3]

    key = jax.random.PRNGKey(0)
    keys = jax.random.split(key, len(dims))  # keys[0] for input, rest for layers

    x = jax.random.normal(keys[0], (batch, input_size), jnp.float32)

    params = [init_linear(keys[i + 1], dims[i], dims[i + 1]) for i in range(4)]

    # Host-side padding + packing (done once per model, not per call).
    w_slab, b_slab, row_offsets = pack_params(params, pad_width=PAD_WIDTH)

    out = mlp_forward(x, w_slab, b_slab, row_offsets, out_features=dims[-1])
    out = jax.block_until_ready(out)

    ref = reference_forward(x, params)
    assert out.shape == (batch, dims[-1]), out.shape
    assert jnp.allclose(out, ref, atol=1e-4, rtol=1e-4), "mismatch vs reference"

    print("KERNEL_OK")
</pallas_src>

<mosaic_0001>
module attributes {stable_mosaic.version = 11 : i64} {
  func.func @kernel(%arg0: memref<8x32xf32, #tpu.memory_space<vmem>>, %arg1: memref<800x256xf32, #tpu.memory_space<vmem>>, %arg2: memref<4x256xf32, #tpu.memory_space<vmem>>, %arg3: memref<8x256xf32, #tpu.memory_space<vmem>>) attributes {dimension_semantics = [], scalar_prefetch = 0 : i64, scratch_operands = 0 : i64, tpu.core_type = #tpu.core_type<tc>} {
    %c0 = arith.constant 0 : index
    %c0_0 = arith.constant 0 : index
    %0 = vector.load %arg0[%c0, %c0_0] : memref<8x32xf32, #tpu.memory_space<vmem>>, vector<8x32xf32>
    %c0_1 = arith.constant 0 : index
    %c0_2 = arith.constant 0 : index
    %1 = vector.load %arg1[%c0_1, %c0_2] : memref<800x256xf32, #tpu.memory_space<vmem>>, vector<32x256xf32>
    %c0_3 = arith.constant 0 : index
    %c0_4 = arith.constant 0 : index
    %2 = vector.load %arg2[%c0_3, %c0_4] : memref<4x256xf32, #tpu.memory_space<vmem>>, vector<1x256xf32>
    %3 = vector.shape_cast %2 : vector<1x256xf32> to vector<1x256xf32>
    %4 = vector.broadcast %3 : vector<1x256xf32> to vector<8x256xf32>
    %cst = arith.constant dense<0.000000e+00> : vector<8x256xf32>
    %5 = tpu.matmul %0, %1, %cst {dimension_numbers = #tpu.dot_dimension_numbers<[1], [0], [0], [1], [0, 0, 1, 1], [], []>} : vector<8x32xf32>, vector<32x256xf32>, vector<8x256xf32> -> vector<8x256xf32>
    %6 = arith.addf %5, %4 : vector<8x256xf32>
    %cst_5 = arith.constant 0.000000e+00 : f32
    %7 = vector.broadcast %cst_5 : f32 to vector<8x256xf32>
    %8 = arith.maximumf %6, %7 : vector<8x256xf32>
    %c32 = arith.constant 32 : index
    %c0_6 = arith.constant 0 : index
    %9 = vector.load %arg1[%c32, %c0_6] : memref<800x256xf32, #tpu.memory_space<vmem>>, vector<256x256xf32>
    %c1 = arith.constant 1 : index
    %c0_7 = arith.constant 0 : index
    %10 = vector.load %arg2[%c1, %c0_7] : memref<4x256xf32, #tpu.memory_space<vmem>>, vector<1x256xf32>
    %11 = vector.shape_cast %10 : vector<1x256xf32> to vector<1x256xf32>
    %12 = vector.broadcast %11 : vector<1x256xf32> to vector<8x256xf32>
    %cst_8 = arith.constant dense<0.000000e+00> : vector<8x256xf32>
    %13 = tpu.matmul %8, %9, %cst_8 {dimension_numbers = #tpu.dot_dimension_numbers<[1], [0], [0], [1], [0, 0, 1, 1], [], []>} : vector<8x256xf32>, vector<256x256xf32>, vector<8x256xf32> -> vector<8x256xf32>
    %14 = arith.addf %13, %12 : vector<8x256xf32>
    %cst_9 = arith.constant 0.000000e+00 : f32
    %15 = vector.broadcast %cst_9 : f32 to vector<8x256xf32>
    %16 = arith.maximumf %14, %15 : vector<8x256xf32>
    %c288 = arith.constant 288 : index
    %c0_10 = arith.constant 0 : index
    %17 = vector.load %arg1[%c288, %c0_10] : memref<800x256xf32, #tpu.memory_space<vmem>>, vector<256x256xf32>
    %c2 = arith.constant 2 : index
    %c0_11 = arith.constant 0 : index
    %18 = vector.load %arg2[%c2, %c0_11] : memref<4x256xf32, #tpu.memory_space<vmem>>, vector<1x256xf32>
    %19 = vector.shape_cast %18 : vector<1x256xf32> to vector<1x256xf32>
    %20 = vector.broadcast %19 : vector<1x256xf32> to vector<8x256xf32>
    %cst_12 = arith.constant dense<0.000000e+00> : vector<8x256xf32>
    %21 = tpu.matmul %16, %17, %cst_12 {dimension_numbers = #tpu.dot_dimension_numbers<[1], [0], [0], [1], [0, 0, 1, 1], [], []>} : vector<8x256xf32>, vector<256x256xf32>, vector<8x256xf32> -> vector<8x256xf32>
    %22 = arith.addf %21, %20 : vector<8x256xf32>
    %cst_13 = arith.constant 0.000000e+00 : f32
    %23 = vector.broadcast %cst_13 : f32 to vector<8x256xf32>
    %24 = arith.maximumf %22, %23 : vector<8x256xf32>
    %c544 = arith.constant 544 : index
    %c0_14 = arith.constant 0 : index
    %25 = vector.load %arg1[%c544, %c0_14] : memref<800x256xf32, #tpu.memory_space<vmem>>, vector<256x256xf32>
    %c3 = arith.constant 3 : index
    %c0_15 = arith.constant 0 : index
    %26 = vector.load %arg2[%c3, %c0_15] : memref<4x256xf32, #tpu.memory_space<vmem>>, vector<1x256xf32>
    %27 = vector.shape_cast %26 : vector<1x256xf32> to vector<1x256xf32>
    %28 = vector.broadcast %27 : vector<1x256xf32> to vector<8x256xf32>
    %cst_16 = arith.constant dense<0.000000e+00> : vector<8x256xf32>
    %29 = tpu.matmul %24, %25, %cst_16 {dimension_numbers = #tpu.dot_dimension_numbers<[1], [0], [0], [1], [0, 0, 1, 1], [], []>} : vector<8x256xf32>, vector<256x256xf32>, vector<8x256xf32> -> vector<8x256xf32>
    %30 = arith.addf %29, %28 : vector<8x256xf32>
    %c0_17 = arith.constant 0 : index
    %c0_18 = arith.constant 0 : index
    %31 = vector.load %arg3[%c0_17, %c0_18] : memref<8x256xf32, #tpu.memory_space<vmem>>, vector<8x256xf32>
    tpu.vector_store %arg3[%c0_17, %c0_18], %30 {strides = array<i32>} : memref<8x256xf32, #tpu.memory_space<vmem>>, vector<8x256xf32>,
    return
  }
}

</mosaic_0001>

<llo_original>
// kernel: tpu_custom_call.1
$region0: #{tpu_custom_call.1}
  #allocation0 [shape = 'u32[]', space=smem, size = 0x4, offset = 0x4, fixed_abs, tag = 'smem constant byte address 0x4 - core index']
  #allocation1 [shape = 'u32[144,128]{1,0:T(1,128)}', space=vmem, size = 0x12000, scoped, tag = 'internal scratch']
  %s0 = inlined_call_operand.hbm [shape: f32[8,32], index: 0, kind: input, shape index: {}]
  %s1 = inlined_call_operand.hbm [shape: f32[800,256], index: 1, kind: input, shape index: {}]
  %s2 = inlined_call_operand.hbm [shape: f32[4,256], index: 2, kind: input, shape index: {}]
  %s3 = inlined_call_operand.hbm [shape: f32[8,256], index: 3, kind: output, shape index: {}]
  %s4 = sld [smem:[#allocation0]]
  $region34: #{tpu_custom_call.1} parent=0
    _
  %s6 = ssub.s32 1, %s4
  %s7 = scalar_select 0, %s6, %s4
  $region1: #{tpu_custom_call.1} parent=0
    #allocation2 [shape = 'u8[4096]{0}', space=vmem, size = 0x1000, scoped, tag = 'input window, operand 0, single buffered']
    #allocation3 [shape = 's32[1]{0}', space=sflag, size = 0x4, scoped, tag = 'scoped memory for tpu_custom_call.1']
    #allocation4 [shape = 's32[1]{0}', space=sflag, size = 0x4, scoped, tag = 'scoped memory for tpu_custom_call.1']
    #allocation5 [shape = 'u8[819200]{0}', space=vmem, size = 0xc8000, scoped, tag = 'input window, operand 1, single buffered']
    #allocation6 [shape = 's32[1]{0}', space=sflag, size = 0x4, scoped, tag = 'scoped memory for tpu_custom_call.1']
    #allocation7 [shape = 'u8[4096]{0}', space=vmem, size = 0x1000, scoped, tag = 'input window, operand 2, single buffered']
    #allocation8 [shape = 'u8[8192]{0}', space=vmem, size = 0x2000, scoped, tag = 'output window, operand 0, single buffered']
    %8 = vsyncpa [#allocation3], 0
    %9 = vsyncpa [#allocation6], 0
    %10 = vsyncpa [#allocation4], 0
    // Predicated region
    $region2: #{tpu_custom_call.1} parent=1 // pred_check
      _
    $region3: #{tpu_custom_call.1} parent=1 // pred_check_branch
      %12 = sbr.rel (0) target = $region5
    $region4: #{tpu_custom_call.1} parent=1 // pred_region
      %s14 = ssub.s32 128, 128
      %15 = vsyncadd [#allocation3], %s14
      %s17 = sshll.u32 [#allocation2], 4
      %s18 = int_to_ptr.vmem [resolvable:$true] %s17
      %20 = dma.hbm_to_vmem [thread:$0]  %s0, 128, %s18, [#allocation3]
    $region5: #{tpu_custom_call.1} parent=1 // pred_fallthru
      _
    // Predicated region
    $region6: #{tpu_custom_call.1} parent=1 // pred_check
      _
    $region7: #{tpu_custom_call.1} parent=1 // pred_check_branch
      %22 = sbr.rel (0) target = $region9
    $region8: #{tpu_custom_call.1} parent=1 // pred_region
      %s24 = ssub.s32 25600, 25600
      %25 = vsyncadd [#allocation6], %s24
      %s26 = sshll.u32 [#allocation5], 4
      %s27 = int_to_ptr.vmem [resolvable:$true] %s26
      %32 = dma.hbm_to_vmem [thread:$0]  %s1, 25600, %s27, [#allocation6], 256, 256, 16
    $region9: #{tpu_custom_call.1} parent=1 // pred_fallthru
      _
    // Predicated region
    $region10: #{tpu_custom_call.1} parent=1 // pred_check
      _
    $region11: #{tpu_custom_call.1} parent=1 // pred_check_branch
      %34 = sbr.rel (0) target = $region13
    $region12: #{tpu_custom_call.1} parent=1 // pred_region
      %s36 = ssub.s32 128, 128
      %37 = vsyncadd [#allocation6], %s36
      %s39 = sshll.u32 [#allocation7], 4
      %s40 = int_to_ptr.vmem [resolvable:$true] %s39
      %42 = dma.hbm_to_vmem [thread:$0]  %s2, 128, %s40, [#allocation6]
    $region13: #{tpu_custom_call.1} parent=1 // pred_fallthru
      _
    // Predicated region
    $region14: #{tpu_custom_call.1} parent=1 // pred_check
      _
    $region15: #{tpu_custom_call.1} parent=1 // pred_check_branch
      %44 = sbr.rel (0) target = $region17
    $region16: #{tpu_custom_call.1} parent=1 // pred_region
      %45 = dma.done [#allocation3], 128
    $region17: #{tpu_custom_call.1} parent=1 // pred_fallthru
      _
    // Predicated region
    $region18: #{tpu_custom_call.1} parent=1 // pred_check
      _
    $region19: #{tpu_custom_call.1} parent=1 // pred_check_branch
      %47 = sbr.rel (0) target = $region21
    $region20: #{tpu_custom_call.1} parent=1 // pred_region
      %48 = dma.done [#allocation6], 25600
    $region21: #{tpu_custom_call.1} parent=1 // pred_fallthru
      _
    // Predicated region
    $region22: #{tpu_custom_call.1} parent=1 // pred_check
      _
    $region23: #{tpu_custom_call.1} parent=1 // pred_check_branch
      %50 = sbr.rel (0) target = $region25
    $region24: #{tpu_custom_call.1} parent=1 // pred_region
      %51 = dma.done [#allocation6], 128
    $region25: #{tpu_custom_call.1} parent=1 // pred_fallthru
      _
    %v52 = vld [vmem:[#allocation2] sm:$0xff]
    %v53 = vld [vmem:[#allocation5] sm:$0xff]
    %v54 = vld [vmem:[#allocation5 + $0x8] sm:$0xff]
    %v55 = vld [vmem:[#allocation5 + $0x10] sm:$0xff]
    %v56 = vld [vmem:[#allocation5 + $0x18] sm:$0xff]
    %v57 = vld [vmem:[#allocation5 + $0x20] sm:$0xff]
    %v58 = vld [vmem:[#allocation5 + $0x28] sm:$0xff]
    %v59 = vld [vmem:[#allocation5 + $0x30] sm:$0xff]
    %v60 = vld [vmem:[#allocation5 + $0x38] sm:$0xff]
    %v61 = vld [vmem:[#allocation7] ss:$4 sm:$0x3]
    %v63 = vlaneseq
    %v64 = vshrl.u32 %v63, 7
    %v65 = vsub.s32 0, %v64
    %v66 = vrot.slane %v61, %v65
    %v67 = vlaneseq
    %v68 = vshrl.u32 %v67, 7
    %v69 = vsub.s32 1, %v68
    %v70 = vrot.slane %v61, %v69
    %vm73 = vcmask 261120
    %v75 = vsel %vm73, %v52, 0
    %77 = vmatprep.subr.mxu0 %v54
    %78 = vmatpush1.msra.mxu0 %v53
    %79 = vmatprep.subr.mxu0 %v56
    %80 = vmatpush1.msra.mxu0 %v55
    %81 = vmatprep.subr.mxu0 %v58
    %82 = vmatpush1.msra.mxu0 %v57
    %83 = vmatprep.subr.mxu0 %v60
    %84 = vmatpush1.msra.mxu0 %v59
    %85 = vmatprep.subr.mxu0 0.0
    %86 = vmatpush1.msra.mxu0 0.0
    %87 = vmatprep.subr.mxu0 0.0
    %88 = vmatpush1.msra.mxu0 0.0
    %89 = vmatprep.subr.mxu0 0.0
    %90 = vmatpush1.msra.mxu0 0.0
    %91 = vmatprep.subr.mxu0 0.0
    %92 = vmatpush1.msra.mxu0 0.0
    %93 = vmatprep.subr.mxu0 0.0
    %94 = vmatpush1.msra.mxu0 0.0
    %95 = vmatprep.subr.mxu0 0.0
    %96 = vmatpush1.msra.mxu0 0.0
    %97 = vmatprep.subr.mxu0 0.0
    %98 = vmatpush1.msra.mxu0 0.0
    %99 = vmatprep.subr.mxu0 0.0
    %100 = vmatpush1.msra.mxu0 0.0
    %101 = vmatprep.subr.mxu0 0.0
    %102 = vmatpush1.msra.mxu0 0.0
    %103 = vmatprep.subr.mxu0 0.0
    %104 = vmatpush1.msra.mxu0 0.0
    %105 = vmatprep.subr.mxu0 0.0
    %106 = vmatpush1.msra.mxu0 0.0
    %107 = vmatprep.subr.mxu0 0.0
    %108 = vmatpush1.msra.mxu0 0.0
    %109 = vmatprep.subr.mxu0 0.0
    %110 = vmatpush1.msra.mxu0 0.0
    %111 = vmatprep.subr.mxu0 0.0
    %112 = vmatpush1.msra.mxu0 0.0
    %113 = vmatprep.subr.mxu0 0.0
    %114 = vmatpush1.msra.mxu0 0.0
    %115 = vmatprep.subr.mxu0 0.0
    %116 = vmatpush1.msra.mxu0 0.0
    %117 = vmatprep.subr.mxu0 0.0
    %118 = vmatpush1.msra.mxu0 0.0
    %119 = vmatprep.subr.mxu0 0.0
    %120 = vmatpush1.msra.mxu0 0.0
    %121 = vmatprep.subr.mxu0 0.0
    %122 = vmatpush1.msra.mxu0 0.0
    %123 = vmatprep.subr.mxu0 0.0
    %124 = vmatpush1.msra.mxu0 0.0
    %125 = vmatprep.subr.mxu0 0.0
    %126 = vmatpush1.msra.mxu0 0.0
    %127 = vmatprep.subr.mxu0 0.0
    %128 = vmatpush1.msra.mxu0 0.0
    %129 = vmatprep.subr.mxu0 0.0
    %130 = vmatpush1.msra.mxu0 0.0
    %131 = vmatprep.subr.mxu0 0.0
    %132 = vmatpush1.msra.mxu0 0.0
    %133 = vmatprep.subr.mxu0 0.0
    %134 = vmatpush1.msra.mxu0 0.0
    %135 = vmatprep.subr.mxu0 0.0
    %136 = vmatpush1.msra.mxu0 0.0
    %137 = vmatprep.subr.mxu0 0.0
    %138 = vmatpush1.msra.mxu0 0.0
    %139 = vmatprep.subr.mxu0 0.0
    %140 = vmatpush1.msra.mxu0 0.0
    %141 = vmatprep.mubr.f32.mxu0 0.0
    %142 = vmatmul.mubr.f32.gmra.mrb[0].mxu0 %v75
    %v143 = vpop.f32.mrb[0].mxu0
    %v144 = vadd.f32 %v66, %v143
    %v145 = vpop.f32.mrb[0].mxu0
    %v146 = vadd.f32 %v70, %v145
    %147 = vdwg.mxu0
    %v148 = vmax.f32 %v144, 0.0
    %v149 = vmax.f32 %v146, 0.0
    %v150 = vld [vmem:[#allocation5 + $0x40] sm:$0xff]
    %v151 = vld [vmem:[#allocation5 + $0x48] sm:$0xff]
    %v152 = vld [vmem:[#allocation5 + $0x50] sm:$0xff]
    %v153 = vld [vmem:[#allocation5 + $0x58] sm:$0xff]
    %v154 = vld [vmem:[#allocation5 + $0x60] sm:$0xff]
    %v155 = vld [vmem:[#allocation5 + $0x68] sm:$0xff]
    %v156 = vld [vmem:[#allocation5 + $0x70] sm:$0xff]
    %v157 = vld [vmem:[#allocation5 + $0x78] sm:$0xff]
    %v158 = vld [vmem:[#allocation5 + $0x80] sm:$0xff]
    %v159 = vld [vmem:[#allocation5 + $0x88] sm:$0xff]
    %v160 = vld [vmem:[#allocation5 + $0x90] sm:$0xff]
    %v161 = vld [vmem:[#allocation5 + $0x98] sm:$0xff]
    %v162 = vld [vmem:[#allocation5 + $0xa0] sm:$0xff]
    %v163 = vld [vmem:[#allocation5 + $0xa8] sm:$0xff]
    %v164 = vld [vmem:[#allocation5 + $0xb0] sm:$0xff]
    %v165 = vld [vmem:[#allocation5 + $0xb8] sm:$0xff]
    %v166 = vld [vmem:[#allocation5 + $0xc0] sm:$0xff]
    %v167 = vld [vmem:[#allocation5 + $0xc8] sm:$0xff]
    %v168 = vld [vmem:[#allocation5 + $0xd0] sm:$0xff]
    %v169 = vld [vmem:[#allocation5 + $0xd8] sm:$0xff]
    %v170 = vld [vmem:[#allocation5 + $0xe0] sm:$0xff]
    %v171 = vld [vmem:[#allocation5 + $0xe8] sm:$0xff]
    %v172 = vld [vmem:[#allocation5 + $0xf0] sm:$0xff]
    %v173 = vld [vmem:[#allocation5 + $0xf8] sm:$0xff]
    %v174 = vld [vmem:[#allocation5 + $0x100] sm:$0xff]
    %v175 = vld [vmem:[#allocation5 + $0x108] sm:$0xff]
    %v176 = vld [vmem:[#allocation5 + $0x110] sm:$0xff]
    %v177 = vld [vmem:[#allocation5 + $0x118] sm:$0xff]
    %v178 = vld [vmem:[#allocation5 + $0x120] sm:$0xff]
    %v179 = vld [vmem:[#allocation5 + $0x128] sm:$0xff]
    %v180 = vld [vmem:[#allocation5 + $0x130] sm:$0xff]
    %v181 = vld [vmem:[#allocation5 + $0x138] sm:$0xff]
    %v182 = vld [vmem:[#allocation5 + $0x140] sm:$0xff]
    %v183 = vld [vmem:[#allocation5 + $0x148] sm:$0xff]
    %v184 = vld [vmem:[#allocation5 + $0x150] sm:$0xff]
    %v185 = vld [vmem:[#allocation5 + $0x158] sm:$0xff]
    %v186 = vld [vmem:[#allocation5 + $0x160] sm:$0xff]
    %v187 = vld [vmem:[#allocation5 + $0x168] sm:$0xff]
    %v188 = vld [vmem:[#allocation5 + $0x170] sm:$0xff]
    %v189 = vld [vmem:[#allocation5 + $0x178] sm:$0xff]
    %v190 = vld [vmem:[#allocation5 + $0x180] sm:$0xff]
    %v191 = vld [vmem:[#allocation5 + $0x188] sm:$0xff]
    %v192 = vld [vmem:[#allocation5 + $0x190] sm:$0xff]
    %v193 = vld [vmem:[#allocation5 + $0x198] sm:$0xff]
    %v194 = vld [vmem:[#allocation5 + $0x1a0] sm:$0xff]
    %v195 = vld [vmem:[#allocation5 + $0x1a8] sm:$0xff]
    %v196 = vld [vmem:[#allocation5 + $0x1b0] sm:$0xff]
    %v197 = vld [vmem:[#allocation5 + $0x1b8] sm:$0xff]
    %v198 = vld [vmem:[#allocation5 + $0x1c0] sm:$0xff]
    %v199 = vld [vmem:[#allocation5 + $0x1c8] sm:$0xff]
    %v200 = vld [vmem:[#allocation5 + $0x1d0] sm:$0xff]
    %v201 = vld [vmem:[#allocation5 + $0x1d8] sm:$0xff]
    %v202 = vld [vmem:[#allocation5 + $0x1e0] sm:$0xff]
    %v203 = vld [vmem:[#allocation5 + $0x1e8] sm:$0xff]
    %v204 = vld [vmem:[#allocation5 + $0x1f0] sm:$0xff]
    %v205 = vld [vmem:[#allocation5 + $0x1f8] sm:$0xff]
    %v206 = vld [vmem:[#allocation5 + $0x200] sm:$0xff]
    %v207 = vld [vmem:[#allocation5 + $0x208] sm:$0xff]
    %v208 = vld [vmem:[#allocation5 + $0x210] sm:$0xff]
    %v209 = vld [vmem:[#allocation5 + $0x218] sm:$0xff]
    %v210 = vld [vmem:[#allocation5 + $0x220] sm:$0xff]
    %v211 = vld [vmem:[#allocation5 + $0x228] sm:$0xff]
    %v212 = vld [vmem:[#allocation5 + $0x230] sm:$0xff]
    %v213 = vld [vmem:[#allocation5 + $0x238] sm:$0xff]
    %s214 = scalar_lea.vmem [#allocation7], 1
    %v215 = vld [vmem:[%s214] ss:$4 sm:$0x3]
    %v217 = vlaneseq
    %v218 = vshrl.u32 %v217, 7
    %v219 = vsub.s32 0, %v218
    %v220 = vrot.slane %v215, %v219
    %v221 = vlaneseq
    %v222 = vshrl.u32 %v221, 7
    %v223 = vsub.s32 1, %v222
    %v224 = vrot.slane %v215, %v223
    %227 = vmatprep.subr.mxu0 %v151
    %228 = vmatpush1.msra.mxu0 %v150
    %229 = vmatprep.subr.mxu0 %v153
    %230 = vmatpush1.msra.mxu0 %v152
    %231 = vmatprep.subr.mxu0 %v155
    %232 = vmatpush1.msra.mxu0 %v154
    %233 = vmatprep.subr.mxu0 %v157
    %234 = vmatpush1.msra.mxu0 %v156
    %235 = vmatprep.subr.mxu0 %v159
    %236 = vmatpush1.msra.mxu0 %v158
    %237 = vmatprep.subr.mxu0 %v161
    %238 = vmatpush1.msra.mxu0 %v160
    %239 = vmatprep.subr.mxu0 %v163
    %240 = vmatpush1.msra.mxu0 %v162
    %241 = vmatprep.subr.mxu0 %v165
    %242 = vmatpush1.msra.mxu0 %v164
    %243 = vmatprep.subr.mxu0 %v167
    %244 = vmatpush1.msra.mxu0 %v166
    %245 = vmatprep.subr.mxu0 %v169
    %246 = vmatpush1.msra.mxu0 %v168
    %247 = vmatprep.subr.mxu0 %v171
    %248 = vmatpush1.msra.mxu0 %v170
    %249 = vmatprep.subr.mxu0 %v173
    %250 = vmatpush1.msra.mxu0 %v172
    %251 = vmatprep.subr.mxu0 %v175
    %252 = vmatpush1.msra.mxu0 %v174
    %253 = vmatprep.subr.mxu0 %v177
    %254 = vmatpush1.msra.mxu0 %v176
    %255 = vmatprep.subr.mxu0 %v179
    %256 = vmatpush1.msra.mxu0 %v178
    %257 = vmatprep.subr.mxu0 %v181
    %258 = vmatpush1.msra.mxu0 %v180
    %259 = vmatprep.subr.mxu0 %v183
    %260 = vmatpush1.msra.mxu0 %v182
    %261 = vmatprep.subr.mxu0 %v185
    %262 = vmatpush1.msra.mxu0 %v184
    %263 = vmatprep.subr.mxu0 %v187
    %264 = vmatpush1.msra.mxu0 %v186
    %265 = vmatprep.subr.mxu0 %v189
    %266 = vmatpush1.msra.mxu0 %v188
    %267 = vmatprep.subr.mxu0 %v191
    %268 = vmatpush1.msra.mxu0 %v190
    %269 = vmatprep.subr.mxu0 %v193
    %270 = vmatpush1.msra.mxu0 %v192
    %271 = vmatprep.subr.mxu0 %v195
    %272 = vmatpush1.msra.mxu0 %v194
    %273 = vmatprep.subr.mxu0 %v197
    %274 = vmatpush1.msra.mxu0 %v196
    %275 = vmatprep.subr.mxu0 %v199
    %276 = vmatpush1.msra.mxu0 %v198
    %277 = vmatprep.subr.mxu0 %v201
    %278 = vmatpush1.msra.mxu0 %v200
    %279 = vmatprep.subr.mxu0 %v203
    %280 = vmatpush1.msra.mxu0 %v202
    %281 = vmatprep.subr.mxu0 %v205
    %282 = vmatpush1.msra.mxu0 %v204
    %283 = vmatprep.subr.mxu0 %v207
    %284 = vmatpush1.msra.mxu0 %v206
    %285 = vmatprep.subr.mxu0 %v209
    %286 = vmatpush1.msra.mxu0 %v208
    %287 = vmatprep.subr.mxu0 %v211
    %288 = vmatpush1.msra.mxu0 %v210
    %289 = vmatprep.subr.mxu0 %v213
    %290 = vmatpush1.msra.mxu0 %v212
    %291 = vmatprep.mubr.f32.mxu0 %v149
    %292 = vmatmul.mubr.f32.gmra.mrb[0].mxu0 %v148
    %v293 = vpop.f32.mrb[0].mxu0
    %v294 = vadd.f32 %v220, %v293
    %v295 = vpop.f32.mrb[0].mxu0
    %v296 = vadd.f32 %v224, %v295
    %297 = vdwg.mxu0
    %v298 = vmax.f32 %v294, 0.0
    %v299 = vmax.f32 %v296, 0.0
    %v300 = vld [vmem:[#allocation5 + $0x240] sm:$0xff]
    %v301 = vld [vmem:[#allocation5 + $0x248] sm:$0xff]
    %v302 = vld [vmem:[#allocation5 + $0x250] sm:$0xff]
    %v303 = vld [vmem:[#allocation5 + $0x258] sm:$0xff]
    %v304 = vld [vmem:[#allocation5 + $0x260] sm:$0xff]
    %v305 = vld [vmem:[#allocation5 + $0x268] sm:$0xff]
    %v306 = vld [vmem:[#allocation5 + $0x270] sm:$0xff]
    %v307 = vld [vmem:[#allocation5 + $0x278] sm:$0xff]
    %v308 = vld [vmem:[#allocation5 + $0x280] sm:$0xff]
    %v309 = vld [vmem:[#allocation5 + $0x288] sm:$0xff]
    %v310 = vld [vmem:[#allocation5 + $0x290] sm:$0xff]
    %v311 = vld [vmem:[#allocation5 + $0x298] sm:$0xff]
    %v312 = vld [vmem:[#allocation5 + $0x2a0] sm:$0xff]
    %v313 = vld [vmem:[#allocation5 + $0x2a8] sm:$0xff]
    %v314 = vld [vmem:[#allocation5 + $0x2b0] sm:$0xff]
    %v315 = vld [vmem:[#allocation5 + $0x2b8] sm:$0xff]
    %v316 = vld [vmem:[#allocation5 + $0x2c0] sm:$0xff]
    %v317 = vld [vmem:[#allocation5 + $0x2c8] sm:$0xff]
    %v318 = vld [vmem:[#allocation5 + $0x2d0] sm:$0xff]
    %v319 = vld [vmem:[#allocation5 + $0x2d8] sm:$0xff]
    %v320 = vld [vmem:[#allocation5 + $0x2e0] sm:$0xff]
    %v321 = vld [vmem:[#allocation5 + $0x2e8] sm:$0xff]
    %v322 = vld [vmem:[#allocation5 + $0x2f0] sm:$0xff]
    %v323 = vld [vmem:[#allocation5 + $0x2f8] sm:$0xff]
    %v324 = vld [vmem:[#allocation5 + $0x300] sm:$0xff]
    %v325 = vld [vmem:[#allocation5 + $0x308] sm:$0xff]
    %v326 = vld [vmem:[#allocation5 + $0x310] sm:$0xff]
    %v327 = vld [vmem:[#allocation5 + $0x318] sm:$0xff]
    %v328 = vld [vmem:[#allocation5 + $0x320] sm:$0xff]
    %v329 = vld [vmem:[#allocation5 + $0x328] sm:$0xff]
    %v330 = vld [vmem:[#allocation5 + $0x330] sm:$0xff]
    %v331 = vld [vmem:[#allocation5 + $0x338] sm:$0xff]
    %v332 = vld [vmem:[#allocation5 + $0x340] sm:$0xff]
    %v333 = vld [vmem:[#allocation5 + $0x348] sm:$0xff]
    %v334 = vld [vmem:[#allocation5 + $0x350] sm:$0xff]
    %v335 = vld [vmem:[#allocation5 + $0x358] sm:$0xff]
    %v336 = vld [vmem:[#allocation5 + $0x360] sm:$0xff]
    %v337 = vld [vmem:[#allocation5 + $0x368] sm:$0xff]
    %v338 = vld [vmem:[#allocation5 + $0x370] sm:$0xff]
    %v339 = vld [vmem:[#allocation5 + $0x378] sm:$0xff]
    %v340 = vld [vmem:[#allocation5 + $0x380] sm:$0xff]
    %v341 = vld [vmem:[#allocation5 + $0x388] sm:$0xff]
    %v342 = vld [vmem:[#allocation5 + $0x390] sm:$0xff]
    %v343 = vld [vmem:[#allocation5 + $0x398] sm:$0xff]
    %v344 = vld [vmem:[#allocation5 + $0x3a0] sm:$0xff]
    %v345 = vld [vmem:[#allocation5 + $0x3a8] sm:$0xff]
    %v346 = vld [vmem:[#allocation5 + $0x3b0] sm:$0xff]
    %v347 = vld [vmem:[#allocation5 + $0x3b8] sm:$0xff]
    %v348 = vld [vmem:[#allocation5 + $0x3c0] sm:$0xff]
    %v349 = vld [vmem:[#allocation5 + $0x3c8] sm:$0xff]
    %v350 = vld [vmem:[#allocation5 + $0x3d0] sm:$0xff]
    %v351 = vld [vmem:[#allocation5 + $0x3d8] sm:$0xff]
    %v352 = vld [vmem:[#allocation5 + $0x3e0] sm:$0xff]
    %v353 = vld [vmem:[#allocation5 + $0x3e8] sm:$0xff]
    %v354 = vld [vmem:[#allocation5 + $0x3f0] sm:$0xff]
    %v355 = vld [vmem:[#allocation5 + $0x3f8] sm:$0xff]
    %v356 = vld [vmem:[#allocation5 + $0x400] sm:$0xff]
    %v357 = vld [vmem:[#allocation5 + $0x408] sm:$0xff]
    %v358 = vld [vmem:[#allocation5 + $0x410] sm:$0xff]
    %v359 = vld [vmem:[#allocation5 + $0x418] sm:$0xff]
    %v360 = vld [vmem:[#allocation5 + $0x420] sm:$0xff]
    %v361 = vld [vmem:[#allocation5 + $0x428] sm:$0xff]
    %v362 = vld [vmem:[#allocation5 + $0x430] sm:$0xff]
    %v363 = vld [vmem:[#allocation5 + $0x438] sm:$0xff]
    %s364 = scalar_lea.vmem [#allocation7], 2
    %v365 = vld [vmem:[%s364] ss:$4 sm:$0x3]
    %v367 = vlaneseq
    %v368 = vshrl.u32 %v367, 7
    %v369 = vsub.s32 0, %v368
    %v370 = vrot.slane %v365, %v369
    %v371 = vlaneseq
    %v372 = vshrl.u32 %v371, 7
    %v373 = vsub.s32 1, %v372
    %v374 = vrot.slane %v365, %v373
    %377 = vmatprep.subr.mxu0 %v301
    %378 = vmatpush1.msra.mxu0 %v300
    %379 = vmatprep.subr.mxu0 %v303
    %380 = vmatpush1.msra.mxu0 %v302
    %381 = vmatprep.subr.mxu0 %v305
    %382 = vmatpush1.msra.mxu0 %v304
    %383 = vmatprep.subr.mxu0 %v307
    %384 = vmatpush1.msra.mxu0 %v306
    %385 = vmatprep.subr.mxu0 %v309
    %386 = vmatpush1.msra.mxu0 %v308
    %387 = vmatprep.subr.mxu0 %v311
    %388 = vmatpush1.msra.mxu0 %v310
    %389 = vmatprep.subr.mxu0 %v313
    %390 = vmatpush1.msra.mxu0 %v312
    %391 = vmatprep.subr.mxu0 %v315
    %392 = vmatpush1.msra.mxu0 %v314
    %393 = vmatprep.subr.mxu0 %v317
    %394 = vmatpush1.msra.mxu0 %v316
    %395 = vmatprep.subr.mxu0 %v319
    %396 = vmatpush1.msra.mxu0 %v318
    %397 = vmatprep.subr.mxu0 %v321
    %398 = vmatpush1.msra.mxu0 %v320
    %399 = vmatprep.subr.mxu0 %v323
    %400 = vmatpush1.msra.mxu0 %v322
    %401 = vmatprep.subr.mxu0 %v325
    %402 = vmatpush1.msra.mxu0 %v324
    %403 = vmatprep.subr.mxu0 %v327
    %404 = vmatpush1.msra.mxu0 %v326
    %405 = vmatprep.subr.mxu0 %v329
    %406 = vmatpush1.msra.mxu0 %v328
    %407 = vmatprep.subr.mxu0 %v331
    %408 = vmatpush1.msra.mxu0 %v330
    %409 = vmatprep.subr.mxu0 %v333
    %410 = vmatpush1.msra.mxu0 %v332
    %411 = vmatprep.subr.mxu0 %v335
    %412 = vmatpush1.msra.mxu0 %v334
    %413 = vmatprep.subr.mxu0 %v337
    %414 = vmatpush1.msra.mxu0 %v336
    %415 = vmatprep.subr.mxu0 %v339
    %416 = vmatpush1.msra.mxu0 %v338
    %417 = vmatprep.subr.mxu0 %v341
    %418 = vmatpush1.msra.mxu0 %v340
    %419 = vmatprep.subr.mxu0 %v343
    %420 = vmatpush1.msra.mxu0 %v342
    %421 = vmatprep.subr.mxu0 %v345
    %422 = vmatpush1.msra.mxu0 %v344
    %423 = vmatprep.subr.mxu0 %v347
    %424 = vmatpush1.msra.mxu0 %v346
    %425 = vmatprep.subr.mxu0 %v349
    %426 = vmatpush1.msra.mxu0 %v348
    %427 = vmatprep.subr.mxu0 %v351
    %428 = vmatpush1.msra.mxu0 %v350
    %429 = vmatprep.subr.mxu0 %v353
    %430 = vmatpush1.msra.mxu0 %v352
    %431 = vmatprep.subr.mxu0 %v355
    %432 = vmatpush1.msra.mxu0 %v354
    %433 = vmatprep.subr.mxu0 %v357
    %434 = vmatpush1.msra.mxu0 %v356
    %435 = vmatprep.subr.mxu0 %v359
    %436 = vmatpush1.msra.mxu0 %v358
    %437 = vmatprep.subr.mxu0 %v361
    %438 = vmatpush1.msra.mxu0 %v360
    %439 = vmatprep.subr.mxu0 %v363
    %440 = vmatpush1.msra.mxu0 %v362
    %441 = vmatprep.mubr.f32.mxu0 %v299
    %442 = vmatmul.mubr.f32.gmra.mrb[0].mxu0 %v298
    %v443 = vpop.f32.mrb[0].mxu0
    %v444 = vadd.f32 %v370, %v443
    %v445 = vpop.f32.mrb[0].mxu0
    %v446 = vadd.f32 %v374, %v445
    %447 = vdwg.mxu0
    %v448 = vmax.f32 %v444, 0.0
    %v449 = vmax.f32 %v446, 0.0
    %v450 = vld [vmem:[#allocation5 + $0x440] sm:$0xff]
    %v451 = vld [vmem:[#allocation5 + $0x448] sm:$0xff]
    %v452 = vld [vmem:[#allocation5 + $0x450] sm:$0xff]
    %v453 = vld [vmem:[#allocation5 + $0x458] sm:$0xff]
    %v454 = vld [vmem:[#allocation5 + $0x460] sm:$0xff]
    %v455 = vld [vmem:[#allocation5 + $0x468] sm:$0xff]
    %v456 = vld [vmem:[#allocation5 + $0x470] sm:$0xff]
    %v457 = vld [vmem:[#allocation5 + $0x478] sm:$0xff]
    %v458 = vld [vmem:[#allocation5 + $0x480] sm:$0xff]
    %v459 = vld [vmem:[#allocation5 + $0x488] sm:$0xff]
    %v460 = vld [vmem:[#allocation5 + $0x490] sm:$0xff]
    %v461 = vld [vmem:[#allocation5 + $0x498] sm:$0xff]
    %v462 = vld [vmem:[#allocation5 + $0x4a0] sm:$0xff]
    %v463 = vld [vmem:[#allocation5 + $0x4a8] sm:$0xff]
    %v464 = vld [vmem:[#allocation5 + $0x4b0] sm:$0xff]
    %v465 = vld [vmem:[#allocation5 + $0x4b8] sm:$0xff]
    %v466 = vld [vmem:[#allocation5 + $0x4c0] sm:$0xff]
    %v467 = vld [vmem:[#allocation5 + $0x4c8] sm:$0xff]
    %v468 = vld [vmem:[#allocation5 + $0x4d0] sm:$0xff]
    %v469 = vld [vmem:[#allocation5 + $0x4d8] sm:$0xff]
    %v470 = vld [vmem:[#allocation5 + $0x4e0] sm:$0xff]
    %v471 = vld [vmem:[#allocation5 + $0x4e8] sm:$0xff]
    %v472 = vld [vmem:[#allocation5 + $0x4f0] sm:$0xff]
    %v473 = vld [vmem:[#allocation5 + $0x4f8] sm:$0xff]
    %v474 = vld [vmem:[#allocation5 + $0x500] sm:$0xff]
    %v475 = vld [vmem:[#allocation5 + $0x508] sm:$0xff]
    %v476 = vld [vmem:[#allocation5 + $0x510] sm:$0xff]
    %v477 = vld [vmem:[#allocation5 + $0x518] sm:$0xff]
    %v478 = vld [vmem:[#allocation5 + $0x520] sm:$0xff]
    %v479 = vld [vmem:[#allocation5 + $0x528] sm:$0xff]
    %v480 = vld [vmem:[#allocation5 + $0x530] sm:$0xff]
    %v481 = vld [vmem:[#allocation5 + $0x538] sm:$0xff]
    %v482 = vld [vmem:[#allocation5 + $0x540] sm:$0xff]
    %v483 = vld [vmem:[#allocation5 + $0x548] sm:$0xff]
    %v484 = vld [vmem:[#allocation5 + $0x550] sm:$0xff]
    %v485 = vld [vmem:[#allocation5 + $0x558] sm:$0xff]
    %v486 = vld [vmem:[#allocation5 + $0x560] sm:$0xff]
    %v487 = vld [vmem:[#allocation5 + $0x568] sm:$0xff]
    %v488 = vld [vmem:[#allocation5 + $0x570] sm:$0xff]
    %v489 = vld [vmem:[#allocation5 + $0x578] sm:$0xff]
    %v490 = vld [vmem:[#allocation5 + $0x580] sm:$0xff]
    %v491 = vld [vmem:[#allocation5 + $0x588] sm:$0xff]
    %v492 = vld [vmem:[#allocation5 + $0x590] sm:$0xff]
    %v493 = vld [vmem:[#allocation5 + $0x598] sm:$0xff]
    %v494 = vld [vmem:[#allocation5 + $0x5a0] sm:$0xff]
    %v495 = vld [vmem:[#allocation5 + $0x5a8] sm:$0xff]
    %v496 = vld [vmem:[#allocation5 + $0x5b0] sm:$0xff]
    %v497 = vld [vmem:[#allocation5 + $0x5b8] sm:$0xff]
    %v498 = vld [vmem:[#allocation5 + $0x5c0] sm:$0xff]
    %v499 = vld [vmem:[#allocation5 + $0x5c8] sm:$0xff]
    %v500 = vld [vmem:[#allocation5 + $0x5d0] sm:$0xff]
    %v501 = vld [vmem:[#allocation5 + $0x5d8] sm:$0xff]
    %v502 = vld [vmem:[#allocation5 + $0x5e0] sm:$0xff]
    %v503 = vld [vmem:[#allocation5 + $0x5e8] sm:$0xff]
    %v504 = vld [vmem:[#allocation5 + $0x5f0] sm:$0xff]
    %v505 = vld [vmem:[#allocation5 + $0x5f8] sm:$0xff]
    %v506 = vld [vmem:[#allocation5 + $0x600] sm:$0xff]
    %v507 = vld [vmem:[#allocation5 + $0x608] sm:$0xff]
    %v508 = vld [vmem:[#allocation5 + $0x610] sm:$0xff]
    %v509 = vld [vmem:[#allocation5 + $0x618] sm:$0xff]
    %v510 = vld [vmem:[#allocation5 + $0x620] sm:$0xff]
    %v511 = vld [vmem:[#allocation5 + $0x628] sm:$0xff]
    %v512 = vld [vmem:[#allocation5 + $0x630] sm:$0xff]
    %v513 = vld [vmem:[#allocation5 + $0x638] sm:$0xff]
    %s514 = scalar_lea.vmem [#allocation7], 3
    %v515 = vld [vmem:[%s514] ss:$4 sm:$0x3]
    %v517 = vlaneseq
    %v518 = vshrl.u32 %v517, 7
    %v519 = vsub.s32 0, %v518
    %v520 = vrot.slane %v515, %v519
    %v521 = vlaneseq
    %v522 = vshrl.u32 %v521, 7
    %v523 = vsub.s32 1, %v522
    %v524 = vrot.slane %v515, %v523
    %527 = vmatprep.subr.mxu0 %v451
    %528 = vmatpush1.msra.mxu0 %v450
    %529 = vmatprep.subr.mxu0 %v453
    %530 = vmatpush1.msra.mxu0 %v452
    %531 = vmatprep.subr.mxu0 %v455
    %532 = vmatpush1.msra.mxu0 %v454
    %533 = vmatprep.subr.mxu0 %v457
    %534 = vmatpush1.msra.mxu0 %v456
    %535 = vmatprep.subr.mxu0 %v459
    %536 = vmatpush1.msra.mxu0 %v458
    %537 = vmatprep.subr.mxu0 %v461
    %538 = vmatpush1.msra.mxu0 %v460
    %539 = vmatprep.subr.mxu0 %v463
    %540 = vmatpush1.msra.mxu0 %v462
    %541 = vmatprep.subr.mxu0 %v465
    %542 = vmatpush1.msra.mxu0 %v464
    %543 = vmatprep.subr.mxu0 %v467
    %544 = vmatpush1.msra.mxu0 %v466
    %545 = vmatprep.subr.mxu0 %v469
    %546 = vmatpush1.msra.mxu0 %v468
    %547 = vmatprep.subr.mxu0 %v471
    %548 = vmatpush1.msra.mxu0 %v470
    %549 = vmatprep.subr.mxu0 %v473
    %550 = vmatpush1.msra.mxu0 %v472
    %551 = vmatprep.subr.mxu0 %v475
    %552 = vmatpush1.msra.mxu0 %v474
    %553 = vmatprep.subr.mxu0 %v477
    %554 = vmatpush1.msra.mxu0 %v476
    %555 = vmatprep.subr.mxu0 %v479
    %556 = vmatpush1.msra.mxu0 %v478
    %557 = vmatprep.subr.mxu0 %v481
    %558 = vmatpush1.msra.mxu0 %v480
    %559 = vmatprep.subr.mxu0 %v483
    %560 = vmatpush1.msra.mxu0 %v482
    %561 = vmatprep.subr.mxu0 %v485
    %562 = vmatpush1.msra.mxu0 %v484
    %563 = vmatprep.subr.mxu0 %v487
    %564 = vmatpush1.msra.mxu0 %v486
    %565 = vmatprep.subr.mxu0 %v489
    %566 = vmatpush1.msra.mxu0 %v488
    %567 = vmatprep.subr.mxu0 %v491
    %568 = vmatpush1.msra.mxu0 %v490
    %569 = vmatprep.subr.mxu0 %v493
    %570 = vmatpush1.msra.mxu0 %v492
    %571 = vmatprep.subr.mxu0 %v495
    %572 = vmatpush1.msra.mxu0 %v494
    %573 = vmatprep.subr.mxu0 %v497
    %574 = vmatpush1.msra.mxu0 %v496
    %575 = vmatprep.subr.mxu0 %v499
    %576 = vmatpush1.msra.mxu0 %v498
    %577 = vmatprep.subr.mxu0 %v501
    %578 = vmatpush1.msra.mxu0 %v500
    %579 = vmatprep.subr.mxu0 %v503
    %580 = vmatpush1.msra.mxu0 %v502
    %581 = vmatprep.subr.mxu0 %v505
    %582 = vmatpush1.msra.mxu0 %v504
    %583 = vmatprep.subr.mxu0 %v507
    %584 = vmatpush1.msra.mxu0 %v506
    %585 = vmatprep.subr.mxu0 %v509
    %586 = vmatpush1.msra.mxu0 %v508
    %587 = vmatprep.subr.mxu0 %v511
    %588 = vmatpush1.msra.mxu0 %v510
    %589 = vmatprep.subr.mxu0 %v513
    %590 = vmatpush1.msra.mxu0 %v512
    %591 = vmatprep.mubr.f32.mxu0 %v449
    %592 = vmatmul.mubr.f32.gmra.mrb[0].mxu0 %v448
    %v593 = vpop.f32.mrb[0].mxu0
    %v594 = vadd.f32 %v520, %v593
    %v595 = vpop.f32.mrb[0].mxu0
    %v596 = vadd.f32 %v524, %v595
    %597 = vdwg.mxu0
    %598 = vst [vmem:[#allocation8] sm:$0xff] %v594
    %599 = vst [vmem:[#allocation8 + $0x8] sm:$0xff] %v596
    // Predicated region
    $region26: #{tpu_custom_call.1} parent=1 // pred_check
      _
    $region27: #{tpu_custom_call.1} parent=1 // pred_check_branch
      %601 = sbr.rel (0) target = $region29
    $region28: #{tpu_custom_call.1} parent=1 // pred_region
      %s603 = ssub.s32 256, 256
      %604 = vsyncadd [#allocation4], %s603
      %s606 = sshll.u32 [#allocation8], 4
      %s607 = int_to_ptr.vmem [resolvable:$true] %s606
      %609 = dma.vmem_to_hbm [thread:$0]  %s607, 256, %s3, [#allocation4]
    $region29: #{tpu_custom_call.1} parent=1 // pred_fallthru
      _
    // Predicated region
    $region30: #{tpu_custom_call.1} parent=1 // pred_check
      _
    $region31: #{tpu_custom_call.1} parent=1 // pred_check_branch
      %611 = sbr.rel (0) target = $region33
    $region32: #{tpu_custom_call.1} parent=1 // pred_region
      %612 = dma.done [#allocation4], 256
    $region33: #{tpu_custom_call.1} parent=1 // pred_fallthru
      _
    %613 = vsyncpa [#allocation3], 1
    %614 = vsyncpa [#allocation6], 1
    %615 = vsyncpa [#allocation4], 1

</llo_original>
